<compile_context>
chip_gen: v7x
topology: tpu7x:2x2x1
jax: 0.10.0
libtpu: 0.0.40
codegen_flags: <defaults>
</compile_context>

<pallas_src>
import functools

import jax
import jax.numpy as jnp
from jax.experimental import pallas as pl
from jax.experimental.pallas import tpu as pltpu

_LANE = 128


def _round_up(x, m):
    return (x + m - 1) // m * m


def _sublane_for(dtype):
    # Sublane packing granularity: 8 rows f32, 16 rows bf16, 32 rows int8/fp8.
    return {1: 32, 2: 16, 4: 8}.get(jnp.dtype(dtype).itemsize, 8)


def _vmem_config():
    """(block_budget_bytes, vmem_limit_bytes, num_tensorcores) per generation."""
    try:
        cap = int(pltpu.get_tpu_info().vmem_capacity_bytes)
    except Exception:  # pragma: no cover - unknown backend / interpret mode
        cap = None
    if cap is not None and cap <= 96 * 1024 * 1024:
        # v7x-class: 64 MiB per TensorCore, 2 TensorCores per chip.
        return 20 * 1024 * 1024, 48 * 1024 * 1024, 2
    if cap is not None:
        # v5e / v6e: 128 MiB VMEM, single TensorCore.
        return 44 * 1024 * 1024, 80 * 1024 * 1024, 1
    # Unknown: conservative settings that fit every generation.
    return 20 * 1024 * 1024, 40 * 1024 * 1024, 1


def _pick_chunk(tp, sublane):
    """Largest row-chunk <= 256 dividing tp (bounds live temporaries)."""
    if tp <= 256:
        return tp
    for cand in range(256, sublane - 1, -sublane):
        if tp % cand == 0:
            return cand
    return tp


def _pretrain_head_kernel(x_ref, w_ref, b_ref, o_ref, *, chunk):
    """One (batch, patch-tile) grid step.

    x_ref: (nvars, tp, d_model)        current batch, all vars, one patch tile
    w_ref: (d_model, patch_len)        grid-invariant
    b_ref: (1, nvars * patch_len)      grid-invariant, bias pre-tiled per var
    o_ref: (tp, nvars * patch_len)     lane-dense, permute-fused output tile
    """
    nvars, tp, d_model = x_ref.shape
    patch_len = w_ref.shape[1]
    w = w_ref[...]
    b = b_ref[...]

    def process(r0):
        # One fused MXU matmul for all vars: free leading-dim merge
        # (nvars, chunk, d_model) -> (nvars*chunk, d_model).
        xs = x_ref[:, pl.ds(r0, chunk), :].reshape(nvars * chunk, d_model)
        y = jnp.dot(xs, w, preferred_element_type=jnp.float32)

        if patch_len % _LANE == 0:
            # Already lane-aligned: per-var stores are full-width (unmasked vst).
            for v in range(nvars):
                sl = slice(v * patch_len, (v + 1) * patch_len)
                o_ref[pl.ds(r0, chunk), sl] = (
                    y[v * chunk:(v + 1) * chunk, :] + b[:, sl]
                ).astype(o_ref.dtype)
        else:
            # Lane-dense assembly: one (chunk, nvars*patch_len) tile, bias added
            # once, single full-width store (no masked sub-128-lane vst per var).
            tile = jnp.concatenate(
                [y[v * chunk:(v + 1) * chunk, :] for v in range(nvars)], axis=-1)
            o_ref[pl.ds(r0, chunk), :] = (tile + b).astype(o_ref.dtype)

    n_chunks = tp // chunk
    if n_chunks == 1:
        process(0)
    else:
        def body(c, carry):
            process(pl.multiple_of(c * chunk, chunk))
            return carry
        jax.lax.fori_loop(0, n_chunks, body, None, unroll=(n_chunks <= 8))


@functools.partial(jax.jit, static_argnames=("tp",))
def pretrain_head_forward(x, weight, bias, *, tp=None):
    """x: [bs, nvars, num_patch, d_model]
    weight: [patch_len, d_model]  (PyTorch nn.Linear layout)
    bias:   [patch_len]
    returns: [bs, num_patch, nvars, patch_len]
    """
    bs, nvars, num_patch, d_model = x.shape
    patch_len = weight.shape[0]

    # Dropout == identity in eval/inference mode.
    # TODO(synk): training-mode dropout would need pltpu.prng_seed /
    #             pltpu.prng_random_bits masking inside the kernel.
    # TODO(synk): optional bf16 cast of x / weight (numerics-visible, ~2x lever
    #             on the HBM-bound read) is left to the model owner.

    w_t = weight.T.astype(x.dtype)                                  # (d_model, patch_len)
    b_wide = jnp.tile(bias, nvars).reshape(1, nvars * patch_len).astype(jnp.float32)

    itemsize = jnp.dtype(x.dtype).itemsize
    sublane = _sublane_for(x.dtype)
    budget, vmem_limit, num_cores = _vmem_config()

    if tp is None:
        # Bytes per patch row (x block + out block), lane padding included.
        row_bytes = (nvars * _round_up(d_model, _LANE)
                     + _round_up(nvars * patch_len, _LANE)) * itemsize
        tp = max(sublane, budget // (2 * row_bytes))                # 2 = double buffer
        if tp >= num_patch:
            tp = num_patch                                          # full axis: always legal
        elif tp >= 512:
            tp = (tp // 512) * 512
        elif tp >= _LANE:
            tp = (tp // _LANE) * _LANE
        else:
            tp = max(sublane, (tp // sublane) * sublane)
        if num_cores >= 2:
            # >=4 grid steps per TensorCore so each core overlaps the next
            # input read with the previous output writeback.
            target = 4 * num_cores
            while bs * pl.cdiv(num_patch, tp) < target and tp > sublane:
                tp = max(sublane, ((tp // 2) // sublane) * sublane)
    else:
        tp = min(tp, num_patch)
        if tp < num_patch:
            tp = max(sublane, (tp // sublane) * sublane)

    chunk = _pick_chunk(tp, sublane)
    grid = (bs, pl.cdiv(num_patch, tp))

    out_bytes = bs * num_patch * nvars * patch_len * itemsize
    cost = pl.CostEstimate(
        flops=2 * bs * nvars * num_patch * d_model * patch_len,
        transcendentals=0,
        bytes_accessed=(x.size * itemsize + w_t.size * itemsize
                        + b_wide.size * 4 + out_bytes),
    )

    kernel = functools.partial(_pretrain_head_kernel, chunk=chunk)

    out_flat = pl.pallas_call(
        kernel,
        out_shape=jax.ShapeDtypeStruct((bs, num_patch, nvars * patch_len), x.dtype),
        grid_spec=pltpu.PrefetchScalarGridSpec(
            num_scalar_prefetch=0,
            grid=grid,
            in_specs=[
                # x: one batch (squeezed), all vars, one patch tile, full d_model.
                pl.BlockSpec((None, nvars, tp, d_model), lambda b, p: (b, 0, p, 0)),
                # Weight / bias: constant index_map -> fetched once, kept resident.
                pl.BlockSpec((d_model, patch_len), lambda b, p: (0, 0)),
                pl.BlockSpec((1, nvars * patch_len), lambda b, p: (0, 0)),
            ],
            # Permute fused here: output row = patch index, lanes = nvars*patch_len.
            out_specs=pl.BlockSpec((None, tp, nvars * patch_len),
                                   lambda b, p: (b, p, 0)),
        ),
        compiler_params=pltpu.CompilerParams(
            dimension_semantics=("parallel", "parallel"),
            vmem_limit_bytes=vmem_limit,
        ),
        cost_estimate=cost,
    )(x, w_t, b_wide)

    # Free last-dim split: realizes permute(0, 2, 1, 3) with zero extra HBM traffic.
    return out_flat.reshape(bs, num_patch, nvars, patch_len)


if __name__ == "__main__":
    key = jax.random.PRNGKey(0)

    def run_case(case_key, bs, nvars, num_patch, d_model, patch_len, **kw):
        kx, kwt, kb = jax.random.split(case_key, 3)
        x = jax.random.normal(kx, (bs, nvars, num_patch, d_model), dtype=jnp.float32)
        # Deterministic nn.Linear-style init: U(-1/sqrt(d_model), 1/sqrt(d_model)).
        bound = 1.0 / (d_model ** 0.5)
        weight = jax.random.uniform(kwt, (patch_len, d_model), jnp.float32, -bound, bound)
        bias = jax.random.uniform(kb, (patch_len,), jnp.float32, -bound, bound)

        out = jax.block_until_ready(pretrain_head_forward(x, weight, bias, **kw))

        # Pure-JAX reference: linear over last dim, then permute(0, 2, 1, 3).
        ref = jnp.transpose(jnp.einsum("bvpd,ld->bvpl", x, weight) + bias, (0, 2, 1, 3))
        assert out.shape == (bs, num_patch, nvars, patch_len), out.shape
        err = float(jnp.max(jnp.abs(out - ref)))
        assert jnp.allclose(out, ref, atol=1e-4, rtol=1e-4), err

    k1, k2 = jax.random.split(key)
    # Small shapes consistent with the module's forward.
    run_case(k1, bs=2, nvars=4, num_patch=8, d_model=32, patch_len=16)
    # Multi-step grid with a ragged patch tail (20 = 8 + 8 + 4), forced tile.
    run_case(k2, bs=2, nvars=3, num_patch=20, d_model=48, patch_len=24, tp=8)

    print("KERNEL_OK")
</pallas_src>

<mosaic_0001>
module attributes {stable_mosaic.version = 11 : i64} {
  func.func @_pretrain_head_kernel(%arg0: i32, %arg1: i32, %arg2: memref<1x4x8x32xf32, #tpu.memory_space<vmem>>, %arg3: memref<32x16xf32, #tpu.memory_space<vmem>>, %arg4: memref<1x64xf32, #tpu.memory_space<vmem>>, %arg5: memref<1x8x64xf32, #tpu.memory_space<vmem>>) attributes {dimension_semantics = [#tpu.dimension_semantics<parallel>, #tpu.dimension_semantics<parallel>], iteration_bounds = array<i64: 2, 1>, scalar_prefetch = 0 : i64, scratch_operands = 0 : i64, tpu.core_type = #tpu.core_type<tc>, window_params = [{transform_indices = @transform_0, window_bounds = array<i64: 1, 4, 8, 32>}, {pipeline_mode = #tpu.pipeline_mode<synchronous>, transform_indices = @transform_1, window_bounds = array<i64: 32, 16>}, {pipeline_mode = #tpu.pipeline_mode<synchronous>, transform_indices = @transform_2, window_bounds = array<i64: 1, 64>}, {transform_indices = @transform_3, window_bounds = array<i64: 1, 8, 64>}]} {
    %c0 = arith.constant 0 : index
    %c0_0 = arith.constant 0 : index
    %0 = vector.load %arg3[%c0, %c0_0] : memref<32x16xf32, #tpu.memory_space<vmem>>, vector<32x16xf32>
    %c0_1 = arith.constant 0 : index
    %c0_2 = arith.constant 0 : index
    %1 = vector.load %arg4[%c0_1, %c0_2] : memref<1x64xf32, #tpu.memory_space<vmem>>, vector<1x64xf32>
    %c0_3 = arith.constant 0 : index
    %c0_4 = arith.constant 0 : index
    %c0_5 = arith.constant 0 : index
    %c0_6 = arith.constant 0 : index
    %2 = vector.load %arg2[%c0_3, %c0_4, %c0_5, %c0_6] : memref<1x4x8x32xf32, #tpu.memory_space<vmem>>, vector<1x4x8x32xf32>
    %3 = vector.shape_cast %2 : vector<1x4x8x32xf32> to vector<4x8x32xf32>
    %4 = vector.shape_cast %3 : vector<4x8x32xf32> to vector<32x32xf32>
    %cst = arith.constant dense<0.000000e+00> : vector<32x16xf32>
    %5 = tpu.matmul %4, %0, %cst {dimension_numbers = #tpu.dot_dimension_numbers<[1], [0], [0], [1], [0, 0, 1, 1], [], []>} : vector<32x32xf32>, vector<32x16xf32>, vector<32x16xf32> -> vector<32x16xf32>
    %6 = vector.extract_strided_slice %5 {offsets = [0, 0], sizes = [8, 16], strides = [1, 1]} : vector<32x16xf32> to vector<8x16xf32>
    %7 = vector.extract_strided_slice %5 {offsets = [8, 0], sizes = [8, 16], strides = [1, 1]} : vector<32x16xf32> to vector<8x16xf32>
    %8 = vector.extract_strided_slice %5 {offsets = [16, 0], sizes = [8, 16], strides = [1, 1]} : vector<32x16xf32> to vector<8x16xf32>
    %9 = vector.extract_strided_slice %5 {offsets = [24, 0], sizes = [8, 16], strides = [1, 1]} : vector<32x16xf32> to vector<8x16xf32>
    %10 = tpu.concatenate %6, %7, %8, %9 in 1 : vector<8x16xf32>, vector<8x16xf32>, vector<8x16xf32>, vector<8x16xf32> -> vector<8x64xf32>
    %11 = vector.broadcast %1 : vector<1x64xf32> to vector<8x64xf32>
    %12 = arith.addf %10, %11 : vector<8x64xf32>
    %c0_7 = arith.constant 0 : index
    %c0_8 = arith.constant 0 : index
    %c0_9 = arith.constant 0 : index
    %13 = vector.load %arg5[%c0_7, %c0_8, %c0_9] : memref<1x8x64xf32, #tpu.memory_space<vmem>>, vector<1x8x64xf32>
    %14 = vector.shape_cast %13 : vector<1x8x64xf32> to vector<8x64xf32>
    %15 = vector.shape_cast %12 : vector<8x64xf32> to vector<1x8x64xf32>
    tpu.vector_store %arg5[%c0_7, %c0_8, %c0_9], %15 {strides = array<i32>} : memref<1x8x64xf32, #tpu.memory_space<vmem>>, vector<1x8x64xf32>,
    return
  }
  func.func @transform_0(%arg0: i32, %arg1: i32) -> (i32, i32, i32, i32) {
    %c0_i32 = arith.constant 0 : i32
    %c0_i32_0 = arith.constant 0 : i32
    %c0_i32_1 = arith.constant 0 : i32
    return %arg0, %c0_i32, %arg1, %c0_i32_0 : i32, i32, i32, i32
  }
  func.func @transform_1(%arg0: i32, %arg1: i32) -> (i32, i32) {
    %c0_i32 = arith.constant 0 : i32
    %c0_i32_0 = arith.constant 0 : i32
    %c0_i32_1 = arith.constant 0 : i32
    return %c0_i32, %c0_i32_0 : i32, i32
  }
  func.func @transform_2(%arg0: i32, %arg1: i32) -> (i32, i32) {
    %c0_i32 = arith.constant 0 : i32
    %c0_i32_0 = arith.constant 0 : i32
    %c0_i32_1 = arith.constant 0 : i32
    return %c0_i32, %c0_i32_0 : i32, i32
  }
  func.func @transform_3(%arg0: i32, %arg1: i32) -> (i32, i32, i32) {
    %c0_i32 = arith.constant 0 : i32
    %c0_i32_0 = arith.constant 0 : i32
    return %arg0, %arg1, %c0_i32 : i32, i32, i32
  }
}

</mosaic_0001>

<llo_original>
// kernel: tile.8
$region0: #{tile.8}
  #allocation0 [shape = 's32[1]{0}', space=sflag, size = 0x4, scoped, tag = 'scoped memory for tile.8']
  %s0 = inlined_call_operand.vmem [shape: f32[16], index: 0, kind: input, shape index: {}]
  %s1 = inlined_call_operand.vmem [shape: f32[4,16], index: 1, kind: output, shape index: {}]
  // Predicated region
  $region2: #{tile.8} parent=0 // pred_check
    _
  $region3: #{tile.8} parent=0 // pred_check_branch
    %3 = sbr.rel (0) target = $region5
  $region4: #{tile.8} parent=0 // pred_region
    _
  $region5: #{tile.8} parent=0 // pred_fallthru
    _
  %v4 = vld [vmem:[%s0] ss:$0 sm:$0xff]
  %5 = vst [vmem:[%s1] sm:$0xf] %v4

// kernel: tile.9
$region0: #{tile.9}
  %s0 = inlined_call_operand.vmem [shape: f32[4,16], index: 0, kind: input, shape index: {}]
  %s1 = inlined_call_operand.vmem [shape: f32[1,64], index: 1, kind: output, shape index: {}]
  $region1: #{tile.9} parent=0
    #allocation0 [shape = 'u8[4096]{0}', space=vmem, size = 0x1000, scoped, tag = 'scoped mem for output reshape']
    #allocation1 [shape = 'u8[4096]{0}', space=vmem, size = 0x1000, scoped, tag = 'scoped mem for input reshape']
    %s3 = sshllo.u32 0, 4
    %v4 = vld [vmem:[%s0] sm:%s3]
    %5 = vst [vmem:[#allocation1] sm:%s3] %v4
    %v6 = vld [vmem:[#allocation1] sm:$0x1]
    %vm7 = vcmask 130048
    %8 = vst.msk [vmem:[#allocation0] sm:$0x1] %vm7, %v6
    %s9 = scalar_lea.vmem [#allocation1], 3
    %v10 = vld [vmem:[%s9] sm:$0x1]
    %11 = vrot.lane.b32.xlu0 %v10, 48
    %v12 = vpop.permute.xlu0 %11
    %vm13 = vcmask 523648
    %14 = vst.msk [vmem:[#allocation0] sm:$0x1] %vm13, %v12
    %s15 = scalar_lea.vmem [#allocation1], 2
    %v16 = vld [vmem:[%s15] sm:$0x1]
    %17 = vrot.lane.b32.xlu0 %v16, 32
    %v18 = vpop.permute.xlu0 %17
    %vm19 = vcmask 392448
    %20 = vst.msk [vmem:[#allocation0] sm:$0x1] %vm19, %v18
    %s21 = scalar_lea.vmem [#allocation1], 1
    %v22 = vld [vmem:[%s21] sm:$0x1]
    %23 = vrot.lane.b32.xlu0 %v22, 16
    %v24 = vpop.permute.xlu0 %23
    %vm25 = vcmask 261248
    %26 = vst.msk [vmem:[#allocation0] sm:$0x1] %vm25, %v24
    %s28 = sshllo.u32 0, 1
    %v30 = vld [vmem:[#allocation0] sm:%s28]
    %s31 = sshllo.u32 0, 1
    %32 = vst [vmem:[%s1] sm:%s31] %v30

// kernel: pretrain_head_forward.1
$region0: #{pretrain_head_forward.1}
  #allocation0 [shape = 'u32[]', space=smem, size = 0x4, offset = 0x4, fixed_abs, tag = 'smem constant byte address 0x4 - core index']
  #allocation1 [shape = 'u32[144,128]{1,0:T(1,128)}', space=vmem, size = 0x12000, scoped, tag = 'internal scratch']
  %s0 = inlined_call_operand.hbm [shape: f32[2,4,8,32], index: 0, kind: input, shape index: {}]
  %s1 = inlined_call_operand.vmem [shape: f32[32,16], index: 1, kind: input, shape index: {}]
  %s2 = inlined_call_operand.vmem [shape: f32[1,64], index: 2, kind: input, shape index: {}]
  %s3 = inlined_call_operand.vmem [shape: f32[2,8,64], index: 3, kind: output, shape index: {}]
  %s4 = sld [smem:[#allocation0]]
  $region49: #{pretrain_head_forward.1} parent=0
    _
  %s6 = ssub.s32 1, %s4
  %s7 = scalar_select 0, %s6, %s4
  $region1: #{pretrain_head_forward.1} parent=0
    #allocation2 [shape = 'u8[32768]{0}', space=vmem, size = 0x8000, scoped, tag = 'input window, operand 0']
    #allocation3 [shape = 's32[2]{0}', space=sflag, size = 0x8, scoped, tag = 'scoped memory for pretrain_head_forward.1']
    %8 = vsyncpa [#allocation3], 0
    %s9 = scalar_lea.sflag [#allocation3], 1
    %10 = vsyncpa %s9, 0
    loop: start=0, step=1, limit=4
    $region2: #{pretrain_head_forward.1} parent=1 // loop_pre_header
      _
    $region3: #{pretrain_head_forward.1} parent=1 // loop_header
      %s12 = sphi 0, %s16
      %p13 = scmp.ge.s32.totalorder %s12, 4
      %s19 = sphi 0, %s31
      %s20 = sphi 0, %s27
      %s21 = sphi 0, %s19
      %s22 = sphi 0, %s20
      %s23 = sphi 0, %s21
      %s24 = sphi 0, %s22
      %s36 = sphi 0, %s38
      %s39 = sphi 0, %s36
      %s40 = sphi 0, %s39
      %s56 = sphi 0, %s40
      %s60 = sphi 0, %s60
      %s62 = sphi 0, %s60
      %s63 = sphi 0, %s62
      %s77 = sphi 0, %s63
      %s81 = sphi 0, %s81
      %s83 = sphi 0, %s81
      %s84 = sphi 0, %s83
      %s98 = sphi 0, %s84
      %s106 = sphi 0, %s108
      %s109 = sphi 0, %s106
      %s110 = sphi 0, %s109
      %s126 = sphi 0, %s110
    $region4: #{pretrain_head_forward.1} parent=1 // loop_header_branch
      %15 = sbr.rel (%p13) target = $region8
    $region5: #{pretrain_head_forward.1} parent=1 // loop_body
      %s17 = ssub.s32 %s12, 1
      %s18 = ssub.s32 %s12, 2
      %s25 = sadd.s32 1, %s20
      %p26 = scmp.ge.s32.totalorder %s25, 1
      %s27 = scalar_select %p26, 0, %s25
      %s28 = sadd.s32 1, %s19
      %s29 = scalar_select %p26, %s28, %s19
      %p30 = scmp.ge.s32.totalorder %s29, 2
      %s31 = scalar_select %p30, 0, %s29
      %s32 = ssub.s32 %s19, %s31
      %s33 = ssub.s32 %s20, %s27
      %s34 = sor.u32 %s32, %s33
      %p35 = scmp.eq.s32.totalorder %s34, 0
      %s37 = sadd.s32 %s36, 1
      %s38 = scalar_select %p35, %s36, %s37
      %p41 = pneg %p35
      %p42 = scmp.eq.s32.totalorder %s12, 1
      %p43 = por %p41, %p42
      %p44 = scmp.ne.s32.totalorder %s36, %s39
      %p45 = scmp.eq.s32.totalorder %s12, 0
      %p46 = por %p44, %p45
      %p47 = scmp.ne.s32.totalorder %s36, %s39
      %p48 = scmp.eq.s32.totalorder %s17, 1
      %p49 = por %p47, %p48
      %p50 = scmp.ne.s32.totalorder %s39, %s40
      %p51 = scmp.eq.s32.totalorder %s17, 0
      %p52 = por %p50, %p51
      %p53 = scmp.ne.s32.totalorder %s39, %s40
      %p54 = scmp.eq.s32.totalorder %s18, 1
      %p55 = por %p53, %p54
      %p57 = scmp.ne.s32.totalorder %s40, %s56
      %p58 = scmp.eq.s32.totalorder %s18, 0
      %p59 = por %p57, %p58
      %s61 = sadd.s32 %s60, 1
      %p64 = scmp.eq.s32.totalorder %s12, 1
      %p65 = scmp.ne.s32.totalorder %s60, %s62
      %p66 = scmp.eq.s32.totalorder %s12, 0
      %p67 = por %p65, %p66
      %p68 = scmp.ne.s32.totalorder %s60, %s62
      %p69 = scmp.eq.s32.totalorder %s17, 1
      %p70 = por %p68, %p69
      %p71 = scmp.ne.s32.totalorder %s62, %s63
      %p72 = scmp.eq.s32.totalorder %s17, 0
      %p73 = por %p71, %p72
      %p74 = scmp.ne.s32.totalorder %s62, %s63
      %p75 = scmp.eq.s32.totalorder %s18, 1
      %p76 = por %p74, %p75
      %p78 = scmp.ne.s32.totalorder %s63, %s77
      %p79 = scmp.eq.s32.totalorder %s18, 0
      %p80 = por %p78, %p79
      %s82 = sadd.s32 %s81, 1
      %p85 = scmp.eq.s32.totalorder %s12, 1
      %p86 = scmp.ne.s32.totalorder %s81, %s83
      %p87 = scmp.eq.s32.totalorder %s12, 0
      %p88 = por %p86, %p87
      %p89 = scmp.ne.s32.totalorder %s81, %s83
      %p90 = scmp.eq.s32.totalorder %s17, 1
      %p91 = por %p89, %p90
      %p92 = scmp.ne.s32.totalorder %s83, %s84
      %p93 = scmp.eq.s32.totalorder %s17, 0
      %p94 = por %p92, %p93
      %p95 = scmp.ne.s32.totalorder %s83, %s84
      %p96 = scmp.eq.s32.totalorder %s18, 1
      %p97 = por %p95, %p96
      %p99 = scmp.ne.s32.totalorder %s84, %s98
      %p100 = scmp.eq.s32.totalorder %s18, 0
      %p101 = por %p99, %p100
      %s102 = ssub.s32 %s19, %s31
      %s103 = ssub.s32 %s20, %s27
      %s104 = sor.u32 %s102, %s103
      %p105 = scmp.eq.s32.totalorder %s104, 0
      %s107 = sadd.s32 %s106, 1
      %s108 = scalar_select %p105, %s106, %s107
      %p111 = pneg %p105
      %p112 = scmp.eq.s32.totalorder %s12, 1
      %p113 = por %p111, %p112
      %p114 = scmp.ne.s32.totalorder %s106, %s109
      %p115 = scmp.eq.s32.totalorder %s12, 0
      %p116 = por %p114, %p115
      %p117 = scmp.ne.s32.totalorder %s106, %s109
      %p118 = scmp.eq.s32.totalorder %s17, 1
      %p119 = por %p117, %p118
      %p120 = scmp.ne.s32.totalorder %s109, %s110
      %p121 = scmp.eq.s32.totalorder %s17, 0
      %p122 = por %p120, %p121
      %p123 = scmp.ne.s32.totalorder %s109, %s110
      %p124 = scmp.eq.s32.totalorder %s18, 1
      %p125 = por %p123, %p124
      %p127 = scmp.ne.s32.totalorder %s110, %s126
      %p128 = scmp.eq.s32.totalorder %s18, 0
      %p129 = por %p127, %p128
      %p130 = scmp.le.s32.totalorder 1, %s12
      %p131 = scmp.lt.s32.totalorder %s12, 3
      %p132 = pnand %p130, %p131
      %p133 = pneg %p132
      // Predicated region
      $region9: #{pretrain_head_forward.1} parent=5 // pred_check
        _
      $region10: #{pretrain_head_forward.1} parent=5 // pred_check_branch
        %135 = sbr.rel (%p132) target = $region12
      $region11: #{pretrain_head_forward.1} parent=5 // pred_region
        %s136 = ssub.s32 %s12, 1
        // Predicated region
        $region13: #{pretrain_head_forward.1} parent=11 // pred_check
          %p137 = pneg %p73
        $region14: #{pretrain_head_forward.1} parent=11 // pred_check_branch
          %139 = sbr.rel (%p137) target = $region16
        $region15: #{pretrain_head_forward.1} parent=11 // pred_region
          _
        $region16: #{pretrain_head_forward.1} parent=11 // pred_fallthru
          _
        // Predicated region
        $region17: #{pretrain_head_forward.1} parent=11 // pred_check
          %p140 = pneg %p94
        $region18: #{pretrain_head_forward.1} parent=11 // pred_check_branch
          %142 = sbr.rel (%p140) target = $region20
        $region19: #{pretrain_head_forward.1} parent=11 // pred_region
          _
        $region20: #{pretrain_head_forward.1} parent=11 // pred_fallthru
          _
      $region12: #{pretrain_head_forward.1} parent=5 // pred_fallthru
        _
      %p143 = scmp.lt.s32.totalorder %s12, 2
      // Predicated region
      $region21: #{pretrain_head_forward.1} parent=5 // pred_check
        %p144 = pneg %p143
      $region22: #{pretrain_head_forward.1} parent=5 // pred_check_branch
        %146 = sbr.rel (%p144) target = $region24
      $region23: #{pretrain_head_forward.1} parent=5 // pred_region
        // Predicated region
        $region25: #{pretrain_head_forward.1} parent=23 // pred_check
          %p147 = pneg %p46
        $region26: #{pretrain_head_forward.1} parent=23 // pred_check_branch
          %149 = sbr.rel (%p147) target = $region28
        $region27: #{pretrain_head_forward.1} parent=23 // pred_region
          %s150 = sand.u32 %s36, 1
          %s151 = scalar_lea.sflag [#allocation3], %s150
          %s152 = sand.u32 %s36, 1
          %s153 = smul.addr %s152, 32
          %s154 = scalar_lea.vmem [#allocation2], %s153
          %s156 = ssub.s32 512, 512
          %157 = vsyncadd %s151, %s156
          %s158 = smul.addr %s19, 4
          %s159 = sadd.s32 %s20, %s158
          %s160 = smul.addr %s159, 128
          %s161 = scalar_lea.hbm %s0, %s160
          %s162 = sshll.u32 %s154, 4
          %s163 = int_to_ptr.vmem [resolvable:$true] %s162
          %168 = dma.hbm_to_vmem [thread:$0]  %s161, 512, %s163, %s151, 128, 128, 8
        $region28: #{pretrain_head_forward.1} parent=23 // pred_fallthru
          _
      $region24: #{pretrain_head_forward.1} parent=5 // pred_fallthru
        _
      %p169 = scmp.le.s32.totalorder 1, %s12
      %p170 = scmp.lt.s32.totalorder %s12, 3
      %p171 = pnand %p169, %p170
      %p172 = pneg %p171
      // Predicated region
      $region29: #{pretrain_head_forward.1} parent=5 // pred_check
        _
      $region30: #{pretrain_head_forward.1} parent=5 // pred_check_branch
        %174 = sbr.rel (%p171) target = $region32
      $region31: #{pretrain_head_forward.1} parent=5 // pred_region
        %s175 = ssub.s32 %s12, 1
        %s176 = sand.u32 %s39, 1
        %s177 = scalar_lea.sflag [#allocation3], %s176
        %s178 = sand.u32 %s39, 1
        %s179 = smul.addr %s178, 32
        %s180 = scalar_lea.vmem [#allocation2], %s179
        // Predicated region
        $region33: #{pretrain_head_forward.1} parent=31 // pred_check
          %p181 = pneg %p52
        $region34: #{pretrain_head_forward.1} parent=31 // pred_check_branch
          %183 = sbr.rel (%p181) target = $region36
        $region35: #{pretrain_head_forward.1} parent=31 // pred_region
          %184 = dma.done %s177, 512
        $region36: #{pretrain_head_forward.1} parent=31 // pred_fallthru
          _
        %s185 = sand.u32 %s39, 1
        %s186 = scalar_lea.sflag [#allocation3], %s185
        %s187 = sand.u32 %s39, 1
        %s188 = smul.addr %s187, 32
        %s189 = scalar_lea.vmem [#allocation2], %s188
        %p190 = pneg %p52
        %p191 = pneg %p49
        %p192 = pneg %p73
        %p193 = pneg %p70
        %p194 = pneg %p94
        %p195 = pneg %p91
        %p196 = pneg %p122
        %p197 = pneg %p119
        %p198 = scmp.lt.s32.totalorder %s21, 1
        %s199 = scalar_select %p198, %s21, 1
        %p200 = scmp.lt.s32.totalorder %s22, 0
        %s201 = scalar_select %p200, %s22, 0
        %s202 = sadd.s32 %s201, %s199
        %s203 = smul.addr %s202, 8
        %s204 = scalar_lea.vmem %s3, %s203
        %p205 = scmp.lt.s32.totalorder %s21, 1
        %s206 = scalar_select %p205, %s21, 1
        %p207 = scmp.lt.s32.totalorder %s22, 0
        %s208 = scalar_select %p207, %s22, 0
        %s209 = sadd.s32 %s208, %s206
        %s210 = smul.addr %s209, 8
        %s211 = scalar_lea.vmem %s3, %s210
        %v212 = vld [vmem:[%s1] sm:$0xff]
        %v213 = vld [vmem:[%s1 + $0x8] sm:$0xff]
        %v214 = vld [vmem:[%s1 + $0x10] sm:$0xff]
        %v215 = vld [vmem:[%s1 + $0x18] sm:$0xff]
        %v216 = vld [vmem:[%s2] sm:$0x1]
        %v217 = vld [vmem:[%s180] sm:$0xff]
        %v218 = vld [vmem:[%s180 + $0x8] sm:$0xff]
        %v219 = vld [vmem:[%s180 + $0x10] sm:$0xff]
        %v220 = vld [vmem:[%s180 + $0x18] sm:$0xff]
        %vm221 = vcmask 261120
        %v223 = vsel %vm221, %v217, 0
        %v226 = vsel %vm221, %v218, 0
        %v229 = vsel %vm221, %v219, 0
        %v232 = vsel %vm221, %v220, 0
        %234 = vmatprep.subr.mxu0 0.0
        %235 = vmatpush1.msra.mxu0 %v212
        %236 = vmatprep.subr.mxu0 0.0
        %237 = vmatpush1.msra.mxu0 %v213
        %238 = vmatprep.subr.mxu0 0.0
        %239 = vmatpush1.msra.mxu0 %v214
        %240 = vmatprep.subr.mxu0 0.0
        %241 = vmatpush1.msra.mxu0 %v215
        %242 = vmatprep.subr.mxu0 0.0
        %243 = vmatpush1.msra.mxu0 0.0
        %244 = vmatprep.subr.mxu0 0.0
        %245 = vmatpush1.msra.mxu0 0.0
        %246 = vmatprep.subr.mxu0 0.0
        %247 = vmatpush1.msra.mxu0 0.0
        %248 = vmatprep.subr.mxu0 0.0
        %249 = vmatpush1.msra.mxu0 0.0
        %250 = vmatprep.subr.mxu0 0.0
        %251 = vmatpush1.msra.mxu0 0.0
        %252 = vmatprep.subr.mxu0 0.0
        %253 = vmatpush1.msra.mxu0 0.0
        %254 = vmatprep.subr.mxu0 0.0
        %255 = vmatpush1.msra.mxu0 0.0
        %256 = vmatprep.subr.mxu0 0.0
        %257 = vmatpush1.msra.mxu0 0.0
        %258 = vmatprep.subr.mxu0 0.0
        %259 = vmatpush1.msra.mxu0 0.0
        %260 = vmatprep.subr.mxu0 0.0
        %261 = vmatpush1.msra.mxu0 0.0
        %262 = vmatprep.subr.mxu0 0.0
        %263 = vmatpush1.msra.mxu0 0.0
        %264 = vmatprep.subr.mxu0 0.0
        %265 = vmatpush1.msra.mxu0 0.0
        %266 = vmatprep.subr.mxu0 0.0
        %267 = vmatpush1.msra.mxu0 0.0
        %268 = vmatprep.subr.mxu0 0.0
        %269 = vmatpush1.msra.mxu0 0.0
        %270 = vmatprep.subr.mxu0 0.0
        %271 = vmatpush1.msra.mxu0 0.0
        %272 = vmatprep.subr.mxu0 0.0
        %273 = vmatpush1.msra.mxu0 0.0
        %274 = vmatprep.subr.mxu0 0.0
        %275 = vmatpush1.msra.mxu0 0.0
        %276 = vmatprep.subr.mxu0 0.0
        %277 = vmatpush1.msra.mxu0 0.0
        %278 = vmatprep.subr.mxu0 0.0
        %279 = vmatpush1.msra.mxu0 0.0
        %280 = vmatprep.subr.mxu0 0.0
        %281 = vmatpush1.msra.mxu0 0.0
        %282 = vmatprep.subr.mxu0 0.0
        %283 = vmatpush1.msra.mxu0 0.0
        %284 = vmatprep.subr.mxu0 0.0
        %285 = vmatpush1.msra.mxu0 0.0
        %286 = vmatprep.subr.mxu0 0.0
        %287 = vmatpush1.msra.mxu0 0.0
        %288 = vmatprep.subr.mxu0 0.0
        %289 = vmatpush1.msra.mxu0 0.0
        %290 = vmatprep.subr.mxu0 0.0
        %291 = vmatpush1.msra.mxu0 0.0
        %292 = vmatprep.subr.mxu0 0.0
        %293 = vmatpush1.msra.mxu0 0.0
        %294 = vmatprep.subr.mxu0 0.0
        %295 = vmatpush1.msra.mxu0 0.0
        %296 = vmatprep.subr.mxu0 0.0
        %297 = vmatpush1.msra.mxu0 0.0
        %298 = vmatprep.mubr.f32.mxu0 0.0
        %299 = vmatmul.mubr.f32.gmra.mrb[0].mxu0 %v223
        %v300 = vpop.f32.mrb[0].mxu0
        %v301 = vadd.f32 0.0, %v300
        %v302 = vpop.f32.mrb[0].mxu0
        %303 = vmatprep.mubr.f32.mxu0 0.0
        %304 = vmatmul.mubr.f32.gmra.mrb[0].mxu0 %v226
        %v305 = vpop.f32.mrb[0].mxu0
        %v306 = vadd.f32 0.0, %v305
        %v307 = vpop.f32.mrb[0].mxu0
        %308 = vmatprep.mubr.f32.mxu0 0.0
        %309 = vmatmul.mubr.f32.gmra.mrb[0].mxu0 %v229
        %v310 = vpop.f32.mrb[0].mxu0
        %v311 = vadd.f32 0.0, %v310
        %v312 = vpop.f32.mrb[0].mxu0
        %313 = vmatprep.mubr.f32.mxu0 0.0
        %314 = vmatmul.mubr.f32.gmra.mrb[0].mxu0 %v232
        %v315 = vpop.f32.mrb[0].mxu0
        %v316 = vadd.f32 0.0, %v315
        %v317 = vpop.f32.mrb[0].mxu0
        %318 = vdwg.mxu0
        %320 = vrot.lane.b32.xlu0 %v306, 16
        %v321 = vpop.permute.xlu0 %320
        %324 = vrot.lane.b32.xlu0 %v311, 32
        %v325 = vpop.permute.xlu0 %324
        %328 = vrot.lane.b32.xlu0 %v316, 48
        %v329 = vpop.permute.xlu0 %328
        %vm331 = vcmask 130048
        %v332 = vsel %vm331, %v301, %v321
        %v333 = vsel %vm221, %v332, %v325
        %vm334 = vcmask 392192
        %v335 = vsel %vm334, %v333, %v329
        %v337 = vlaneseq
        %v338 = vshrl.u32 %v337, 7
        %v339 = vsub.s32 0, %v338
        %v340 = vrot.slane %v216, %v339
        %v342 = vadd.f32 %v335, %v340
        %vm343 = vcmask 523264
        %344 = vst.msk [vmem:[%s211] sm:$0xff] %vm343, %v342
        %p345 = scmp.lt.s32.totalorder %s21, 1
        %s346 = scalar_select %p345, %s21, 1
        %p347 = scmp.lt.s32.totalorder %s22, 0
        %s348 = scalar_select %p347, %s22, 0
        %s349 = sadd.s32 %s348, %s346
        %s350 = smul.addr %s349, 8
        %s351 = scalar_lea.vmem %s3, %s350
        // Predicated region
        $region37: #{pretrain_head_forward.1} parent=31 // pred_check
          %p352 = pneg %p119
        $region38: #{pretrain_head_forward.1} parent=31 // pred_check_branch
          %354 = sbr.rel (%p352) target = $region40
        $region39: #{pretrain_head_forward.1} parent=31 // pred_region
          _
        $region40: #{pretrain_head_forward.1} parent=31 // pred_fallthru
          _
      $region32: #{pretrain_head_forward.1} parent=5 // pred_fallthru
        _
      %p355 = scmp.le.s32.totalorder 2, %s12
      // Predicated region
      $region41: #{pretrain_head_forward.1} parent=5 // pred_check
        %p356 = pneg %p355
      $region42: #{pretrain_head_forward.1} parent=5 // pred_check_branch
        %358 = sbr.rel (%p356) target = $region44
      $region43: #{pretrain_head_forward.1} parent=5 // pred_region
        %s359 = ssub.s32 %s12, 2
        // Predicated region
        $region45: #{pretrain_head_forward.1} parent=43 // pred_check
          %p360 = pneg %p125
        $region46: #{pretrain_head_forward.1} parent=43 // pred_check_branch
          %362 = sbr.rel (%p360) target = $region48
        $region47: #{pretrain_head_forward.1} parent=43 // pred_region
          %p363 = scmp.lt.s32.totalorder %s23, 1
          %s364 = scalar_select %p363, %s23, 1
          %p365 = scmp.lt.s32.totalorder %s24, 0
          %s366 = scalar_select %p365, %s24, 0
          %s367 = sadd.s32 %s366, %s364
          %s368 = smul.addr %s367, 8
          %s369 = scalar_lea.vmem %s3, %s368
        $region48: #{pretrain_head_forward.1} parent=43 // pred_fallthru
          _
      $region44: #{pretrain_head_forward.1} parent=5 // pred_fallthru
        _
    $region6: #{pretrain_head_forward.1} parent=1 // loop_footer
      %s16 = sadd.s32 1, %s12
    $region7: #{pretrain_head_forward.1} parent=1 // loop_footer_branch
      %11 = sbr.rel target = $region3
    $region8: #{pretrain_head_forward.1} parent=1 // loop_exit
      _
    %370 = vsyncpa [#allocation3], 1
    %s371 = scalar_lea.sflag [#allocation3], 1
    %372 = vsyncpa %s371, 1

</llo_original>
